<compile_context>
chip_gen: v6e
topology: v6e:2x2x1
jax: 0.10.0
libtpu: 0.0.40
codegen_flags: <defaults>
</compile_context>

<pallas_src>
import jax
import jax.numpy as jnp
from jax.experimental import pallas as pl
from jax.experimental.pallas import tpu as pltpu

EPS = 1e-5                        # nn.BatchNorm2d default eps
LANE = 128                        # TPU lane width
VMEM_LIMIT = 32 * 1024 * 1024     # explicit scoped-VMEM limit, safe on v5e/v6e/v7x
VMEM_BUDGET = 24 * 1024 * 1024    # per-step pipelined working-set budget used to pick TM


def _round_up(x, m):
    return (x + m - 1) // m * m


def _pick_tm(tm_req, M, K_pad, C_pad, budget=VMEM_BUDGET):
    """Largest M tile (multiple of 16, <= tm_req) whose double-buffered set fits VMEM."""
    tm = max(16, min(_round_up(tm_req, 16), _round_up(M, 16)))

    def need(t):
        return (2 * t * K_pad * 2          # patch tiles, bf16, double-buffered
                + 2 * t * C_pad * 2        # y output tiles, bf16, double-buffered
                + 2 * K_pad * C_pad * 2    # resident bf16 weights (conservatively 2x)
                + 4 * C_pad * 8)           # per-tile stats blocks

    while tm > 16 and need(tm) > budget:
        tm = max(16, _round_up(tm // 2, 16))
    return tm


# ---------------------------------------------------------------------------
# Kernel 1: tiled GEMM (bf16 in, f32 acc, bf16 out) + per-tile channel partial stats
# ---------------------------------------------------------------------------
def _gemm_stats_kernel(p_ref, w_ref, y_ref, s1_ref, s2_ref):
    # p_ref : (TM, K_pad)  bf16       w_ref : (K_pad, C_pad) bf16 (resident)
    # y_ref : (TM, C_pad)  bf16       s1/s2_ref : (1, C_pad) f32 per-tile partials
    y = jnp.dot(p_ref[...], w_ref[...], preferred_element_type=jnp.float32)   # MXU
    y_ref[...] = y.astype(y_ref.dtype)
    # Grid-indexed partial sums (no resident accumulator -> grid axis stays "parallel").
    # XLU cross-sublane reduces are in a separate issue slot -> ~free when MXU/DMA-bound.
    s1_ref[...] = jnp.sum(y, axis=0, keepdims=True)
    s2_ref[...] = jnp.sum(y * y, axis=0, keepdims=True)


# ---------------------------------------------------------------------------
# Kernel 2 (final stage only): tiled normalize (folded scale/shift) + ReLU
# ---------------------------------------------------------------------------
def _bn_relu_kernel(y_ref, scale_ref, shift_ref, o_ref):
    # y_ref: (TM, C_pad) bf16; scale/shift: (1, C_pad) f32 (resident); o_ref: (TM, C_pad) f32
    y = y_ref[...].astype(jnp.float32)
    o_ref[...] = jnp.maximum(y * scale_ref[...] + shift_ref[...], 0.0).astype(o_ref.dtype)


# ---------------------------------------------------------------------------
# conv3x3(stride=2, pad=1, bias=False) as tiled bf16 im2col GEMM + BN batch stats
# ---------------------------------------------------------------------------
def conv_stats(x_nhwc, w_oihw, gamma, beta, *, stride=2, pad=1, tm=512):
    """Returns (y_pad bf16 (M_pad, C_pad), scale (C_pad,), shift (C_pad,), meta)."""
    Cout, Cin, kh, kw = w_oihw.shape
    N, H, W, _ = x_nhwc.shape
    Ho = (H + 2 * pad - kh) // stride + 1
    Wo = (W + 2 * pad - kw) // stride + 1

    # --- im2col glue (pure layout; XLA fuses any upstream elementwise epilogue into it) ---
    xp = jnp.pad(x_nhwc, ((0, 0), (pad, pad), (pad, pad), (0, 0)))
    cols = [xp[:, i:i + stride * (Ho - 1) + 1:stride,
               j:j + stride * (Wo - 1) + 1:stride, :]
            for i in range(kh) for j in range(kw)]
    patches = jnp.stack(cols, axis=3).reshape(N * Ho * Wo, kh * kw * Cin)

    M, K = patches.shape
    K_pad = _round_up(K, LANE)
    C_pad = _round_up(Cout, LANE)
    TM = _pick_tm(tm, M, K_pad, C_pad)
    M_pad = _round_up(M, TM)
    G = M_pad // TM

    patches = jnp.pad(patches, ((0, M_pad - M), (0, K_pad - K))).astype(jnp.bfloat16)
    w_mat = jnp.transpose(w_oihw, (2, 3, 1, 0)).reshape(K, Cout)
    w_mat = jnp.pad(w_mat, ((0, K_pad - K), (0, C_pad - Cout))).astype(jnp.bfloat16)

    cost = pl.CostEstimate(
        flops=2 * M_pad * K_pad * C_pad,
        transcendentals=0,
        bytes_accessed=(M_pad * K_pad * 2 + K_pad * C_pad * 2
                        + M_pad * C_pad * 2 + 2 * G * C_pad * 4))

    y, s1, s2 = pl.pallas_call(
        _gemm_stats_kernel,
        out_shape=(jax.ShapeDtypeStruct((M_pad, C_pad), jnp.bfloat16),
                   jax.ShapeDtypeStruct((G, 1, C_pad), jnp.float32),
                   jax.ShapeDtypeStruct((G, 1, C_pad), jnp.float32)),
        grid=(G,),
        in_specs=[
            pl.BlockSpec((TM, K_pad), lambda i: (i, 0)),
            pl.BlockSpec((K_pad, C_pad), lambda i: (0, 0)),        # weights stay resident
        ],
        out_specs=(
            pl.BlockSpec((TM, C_pad), lambda i: (i, 0)),
            pl.BlockSpec((None, 1, C_pad), lambda i: (i, 0, 0)),   # per-tile partial sums
            pl.BlockSpec((None, 1, C_pad), lambda i: (i, 0, 0)),
        ),
        compiler_params=pltpu.CompilerParams(
            dimension_semantics=("parallel",),     # no resident accumulator -> v7x shards M
            vmem_limit_bytes=VMEM_LIMIT),
        cost_estimate=cost,
    )(patches, w_mat)

    # --- tiny per-channel glue: reduce partials, finalize BN stats, fold gamma/beta ---
    # Padded rows/columns produced exact zeros, so divide by the true M (not M_pad).
    s1 = jnp.sum(s1, axis=(0, 1))
    s2 = jnp.sum(s2, axis=(0, 1))
    mean = s1 / M
    var = jnp.maximum(s2 / M - mean * mean, 0.0)   # biased var (PyTorch fwd normalization)
    inv = jax.lax.rsqrt(var + EPS)
    scale = jnp.pad(gamma, (0, C_pad - Cout)) * inv
    shift = jnp.pad(beta, (0, C_pad - Cout)) - mean * scale
    return y, scale, shift, (N, Ho, Wo, Cout, M)


# ---------------------------------------------------------------------------
# Final-stage folded BN + ReLU as a tiled, "parallel" elementwise Pallas pass
# ---------------------------------------------------------------------------
def bn_relu_pallas(y_pad, scale, shift, *, tm=1024):
    M_pad, C_pad = y_pad.shape
    TM = min(tm, M_pad)
    TM -= TM % 16
    while M_pad % TM:          # M_pad is a multiple of 16, so this terminates (>= 16)
        TM -= 16
    G = M_pad // TM

    cost = pl.CostEstimate(
        flops=2 * M_pad * C_pad, transcendentals=0,
        bytes_accessed=M_pad * C_pad * 2 + M_pad * C_pad * 4 + 2 * C_pad * 4)

    return pl.pallas_call(
        _bn_relu_kernel,
        out_shape=jax.ShapeDtypeStruct((M_pad, C_pad), jnp.float32),
        grid=(G,),
        in_specs=[
            pl.BlockSpec((TM, C_pad), lambda i: (i, 0)),
            pl.BlockSpec((1, C_pad), lambda i: (0, 0)),
            pl.BlockSpec((1, C_pad), lambda i: (0, 0)),
        ],
        out_specs=pl.BlockSpec((TM, C_pad), lambda i: (i, 0)),
        compiler_params=pltpu.CompilerParams(
            dimension_semantics=("parallel",), vmem_limit_bytes=VMEM_LIMIT),
        cost_estimate=cost,
    )(y_pad, scale.reshape(1, C_pad), shift.reshape(1, C_pad))


# ---------------------------------------------------------------------------
# BasicBlock: deterministic parameter init + forward
# ---------------------------------------------------------------------------
class BasicBlockPallas:
    def __init__(self, inplanes, planes, key):
        k1, k2 = jax.random.split(key)
        # kaiming-uniform-like deterministic init (shapes match nn.Conv2d, bias=False)
        self.w1 = jax.random.uniform(k1, (planes, inplanes, 3, 3), jnp.float32,
                                     -1.0, 1.0) / jnp.sqrt(9.0 * inplanes)
        self.w2 = jax.random.uniform(k2, (planes, planes, 3, 3), jnp.float32,
                                     -1.0, 1.0) / jnp.sqrt(9.0 * planes)
        # BatchNorm2d default init: weight=1, bias=0
        self.g1 = jnp.ones((planes,), jnp.float32)
        self.b1 = jnp.zeros((planes,), jnp.float32)
        self.g2 = jnp.ones((planes,), jnp.float32)
        self.b2 = jnp.zeros((planes,), jnp.float32)
        # Note: con1x1 / bn3 are declared in the PyTorch module but never used in forward.

    def __call__(self, x_nchw):
        x = jnp.transpose(x_nchw, (0, 2, 3, 1))                       # NCHW -> NHWC
        # stage 1: conv1 GEMM + BN1 stats (Pallas). BN1 scale/shift + ReLU are folded
        # into the stage-2 im2col glue below (XLA fuses it; no extra HBM round trip).
        y1, sc1, sh1, (N, Ho1, Wo1, C1, M1) = conv_stats(x, self.w1, self.g1, self.b1)
        a1 = jnp.maximum(y1[:M1, :C1].astype(jnp.float32) * sc1[:C1] + sh1[:C1], 0.0)
        a1 = a1.reshape(N, Ho1, Wo1, C1)
        # stage 2: conv2 GEMM + BN2 stats (Pallas), then standalone BN2+ReLU Pallas pass.
        y2, sc2, sh2, (N, Ho2, Wo2, C2, M2) = conv_stats(a1, self.w2, self.g2, self.b2)
        out = bn_relu_pallas(y2, sc2, sh2)
        out = out[:M2, :C2].reshape(N, Ho2, Wo2, C2)
        return jnp.transpose(out, (0, 3, 1, 2))                       # NHWC -> NCHW


# ---------------------------------------------------------------------------
# Pure-JAX reference, precision-matched to the kernel path:
#   bf16 GEMM inputs / f32 accumulation; BN stats from the f32 conv output;
#   normalization applied to the bf16-stored conv output (folded scale/shift).
# ---------------------------------------------------------------------------
def _ref_forward(x_nchw, blk):
    def conv(x_nhwc, w):
        return jax.lax.conv_general_dilated(
            x_nhwc.astype(jnp.bfloat16), w.astype(jnp.bfloat16),
            window_strides=(2, 2), padding=((1, 1), (1, 1)),
            dimension_numbers=("NHWC", "OIHW", "NHWC"),
            preferred_element_type=jnp.float32)

    def bn_relu(y, g, b):
        m = y.shape[0] * y.shape[1] * y.shape[2]
        s1 = jnp.sum(y, axis=(0, 1, 2))
        s2 = jnp.sum(y * y, axis=(0, 1, 2))
        mean = s1 / m
        var = jnp.maximum(s2 / m - mean * mean, 0.0)
        inv = jax.lax.rsqrt(var + EPS)
        scale = g * inv
        shift = b - mean * scale
        yb = y.astype(jnp.bfloat16).astype(jnp.float32)   # kernel stores y in bf16
        return jnp.maximum(yb * scale + shift, 0.0)

    x = jnp.transpose(x_nchw, (0, 2, 3, 1))
    h = bn_relu(conv(x, blk.w1), blk.g1, blk.b1)
    h = bn_relu(conv(h, blk.w2), blk.g2, blk.b2)
    return jnp.transpose(h, (0, 3, 1, 2))


if __name__ == "__main__":
    key = jax.random.PRNGKey(0)
    kx, kp = jax.random.split(key)

    N, Cin, H, W = 2, 4, 16, 16     # x: NCHW, PyTorch convention
    planes = 8
    x = jax.random.normal(kx, (N, Cin, H, W), jnp.float32)

    block = BasicBlockPallas(Cin, planes, kp)
    fwd = jax.jit(block.__call__)

    out = jax.block_until_ready(fwd(x))            # (2, 8, 4, 4)
    ref = jax.block_until_ready(_ref_forward(x, block))

    assert out.shape == (N, planes, H // 4, W // 4), out.shape
    max_err = float(jnp.max(jnp.abs(out - ref)))
    assert jnp.allclose(out, ref, atol=1e-2, rtol=1e-2), max_err

    print("KERNEL_OK")
</pallas_src>

<mosaic_0001>
module attributes {stable_mosaic.version = 11 : i64} {
  func.func @_gemm_stats_kernel(%arg0: i32, %arg1: memref<128x128xbf16, #tpu.memory_space<vmem>>, %arg2: memref<128x128xbf16, #tpu.memory_space<vmem>>, %arg3: memref<128x128xbf16, #tpu.memory_space<vmem>>, %arg4: memref<1x1x128xf32, #tpu.memory_space<vmem>>, %arg5: memref<1x1x128xf32, #tpu.memory_space<vmem>>) attributes {dimension_semantics = [#tpu.dimension_semantics<parallel>], iteration_bounds = array<i64: 1>, scalar_prefetch = 0 : i64, scratch_operands = 0 : i64, tpu.core_type = #tpu.core_type<tc>, window_params = [{transform_indices = @transform_0, window_bounds = array<i64: 128, 128>}, {pipeline_mode = #tpu.pipeline_mode<synchronous>, transform_indices = @transform_1, window_bounds = array<i64: 128, 128>}, {transform_indices = @transform_2, window_bounds = array<i64: 128, 128>}, {transform_indices = @transform_3, window_bounds = array<i64: 1, 1, 128>}, {transform_indices = @transform_4, window_bounds = array<i64: 1, 1, 128>}]} {
    %c0 = arith.constant 0 : index
    %c0_0 = arith.constant 0 : index
    %0 = vector.load %arg1[%c0, %c0_0] : memref<128x128xbf16, #tpu.memory_space<vmem>>, vector<128x128xbf16>
    %c0_1 = arith.constant 0 : index
    %c0_2 = arith.constant 0 : index
    %1 = vector.load %arg2[%c0_1, %c0_2] : memref<128x128xbf16, #tpu.memory_space<vmem>>, vector<128x128xbf16>
    %cst = arith.constant dense<0.000000e+00> : vector<128x128xf32>
    %2 = tpu.matmul %0, %1, %cst {dimension_numbers = #tpu.dot_dimension_numbers<[1], [0], [0], [1], [0, 0, 1, 1], [], []>} : vector<128x128xbf16>, vector<128x128xbf16>, vector<128x128xf32> -> vector<128x128xf32>
    %3 = arith.truncf %2 : vector<128x128xf32> to vector<128x128xbf16>
    %c0_3 = arith.constant 0 : index
    %c0_4 = arith.constant 0 : index
    %4 = vector.load %arg3[%c0_3, %c0_4] : memref<128x128xbf16, #tpu.memory_space<vmem>>, vector<128x128xbf16>
    tpu.vector_store %arg3[%c0_3, %c0_4], %3 {strides = array<i32>} : memref<128x128xbf16, #tpu.memory_space<vmem>>, vector<128x128xbf16>,
    %cst_5 = arith.constant dense<0.000000e+00> : vector<128xf32>
    %5 = vector.multi_reduction <add>, %2, %cst_5 [0] : vector<128x128xf32> to vector<128xf32>
    %6 = vector.shape_cast %5 : vector<128xf32> to vector<1x128xf32>
    %c0_6 = arith.constant 0 : index
    %c0_7 = arith.constant 0 : index
    %c0_8 = arith.constant 0 : index
    %7 = vector.load %arg4[%c0_6, %c0_7, %c0_8] : memref<1x1x128xf32, #tpu.memory_space<vmem>>, vector<1x1x128xf32>
    %8 = vector.shape_cast %7 : vector<1x1x128xf32> to vector<1x128xf32>
    %9 = vector.shape_cast %6 : vector<1x128xf32> to vector<1x1x128xf32>
    tpu.vector_store %arg4[%c0_6, %c0_7, %c0_8], %9 {strides = array<i32>} : memref<1x1x128xf32, #tpu.memory_space<vmem>>, vector<1x1x128xf32>,
    %10 = arith.mulf %2, %2 : vector<128x128xf32>
    %cst_9 = arith.constant dense<0.000000e+00> : vector<128xf32>
    %11 = vector.multi_reduction <add>, %10, %cst_9 [0] : vector<128x128xf32> to vector<128xf32>
    %12 = vector.shape_cast %11 : vector<128xf32> to vector<1x128xf32>
    %c0_10 = arith.constant 0 : index
    %c0_11 = arith.constant 0 : index
    %c0_12 = arith.constant 0 : index
    %13 = vector.load %arg5[%c0_10, %c0_11, %c0_12] : memref<1x1x128xf32, #tpu.memory_space<vmem>>, vector<1x1x128xf32>
    %14 = vector.shape_cast %13 : vector<1x1x128xf32> to vector<1x128xf32>
    %15 = vector.shape_cast %12 : vector<1x128xf32> to vector<1x1x128xf32>
    tpu.vector_store %arg5[%c0_10, %c0_11, %c0_12], %15 {strides = array<i32>} : memref<1x1x128xf32, #tpu.memory_space<vmem>>, vector<1x1x128xf32>,
    return
  }
  func.func @transform_0(%arg0: i32) -> (i32, i32) {
    %c0_i32 = arith.constant 0 : i32
    %c0_i32_0 = arith.constant 0 : i32
    return %arg0, %c0_i32 : i32, i32
  }
  func.func @transform_1(%arg0: i32) -> (i32, i32) {
    %c0_i32 = arith.constant 0 : i32
    %c0_i32_0 = arith.constant 0 : i32
    %c0_i32_1 = arith.constant 0 : i32
    return %c0_i32, %c0_i32_0 : i32, i32
  }
  func.func @transform_2(%arg0: i32) -> (i32, i32) {
    %c0_i32 = arith.constant 0 : i32
    %c0_i32_0 = arith.constant 0 : i32
    return %arg0, %c0_i32 : i32, i32
  }
  func.func @transform_3(%arg0: i32) -> (i32, i32, i32) {
    %c0_i32 = arith.constant 0 : i32
    %c0_i32_0 = arith.constant 0 : i32
    %c0_i32_1 = arith.constant 0 : i32
    return %arg0, %c0_i32, %c0_i32_0 : i32, i32, i32
  }
  func.func @transform_4(%arg0: i32) -> (i32, i32, i32) {
    %c0_i32 = arith.constant 0 : i32
    %c0_i32_0 = arith.constant 0 : i32
    %c0_i32_1 = arith.constant 0 : i32
    return %arg0, %c0_i32, %c0_i32_0 : i32, i32, i32
  }
}

module attributes {stable_mosaic.version = 11 : i64} {
  func.func @_gemm_stats_kernel(%arg0: i32, %arg1: memref<32x128xbf16, #tpu.memory_space<vmem>>, %arg2: memref<128x128xbf16, #tpu.memory_space<vmem>>, %arg3: memref<32x128xbf16, #tpu.memory_space<vmem>>, %arg4: memref<1x1x128xf32, #tpu.memory_space<vmem>>, %arg5: memref<1x1x128xf32, #tpu.memory_space<vmem>>) attributes {dimension_semantics = [#tpu.dimension_semantics<parallel>], iteration_bounds = array<i64: 1>, scalar_prefetch = 0 : i64, scratch_operands = 0 : i64, tpu.core_type = #tpu.core_type<tc>, window_params = [{transform_indices = @transform_0, window_bounds = array<i64: 32, 128>}, {pipeline_mode = #tpu.pipeline_mode<synchronous>, transform_indices = @transform_1, window_bounds = array<i64: 128, 128>}, {transform_indices = @transform_2, window_bounds = array<i64: 32, 128>}, {transform_indices = @transform_3, window_bounds = array<i64: 1, 1, 128>}, {transform_indices = @transform_4, window_bounds = array<i64: 1, 1, 128>}]} {
    %c0 = arith.constant 0 : index
    %c0_0 = arith.constant 0 : index
    %0 = vector.load %arg1[%c0, %c0_0] : memref<32x128xbf16, #tpu.memory_space<vmem>>, vector<32x128xbf16>
    %c0_1 = arith.constant 0 : index
    %c0_2 = arith.constant 0 : index
    %1 = vector.load %arg2[%c0_1, %c0_2] : memref<128x128xbf16, #tpu.memory_space<vmem>>, vector<128x128xbf16>
    %cst = arith.constant dense<0.000000e+00> : vector<32x128xf32>
    %2 = tpu.matmul %0, %1, %cst {dimension_numbers = #tpu.dot_dimension_numbers<[1], [0], [0], [1], [0, 0, 1, 1], [], []>} : vector<32x128xbf16>, vector<128x128xbf16>, vector<32x128xf32> -> vector<32x128xf32>
    %3 = arith.truncf %2 : vector<32x128xf32> to vector<32x128xbf16>
    %c0_3 = arith.constant 0 : index
    %c0_4 = arith.constant 0 : index
    %4 = vector.load %arg3[%c0_3, %c0_4] : memref<32x128xbf16, #tpu.memory_space<vmem>>, vector<32x128xbf16>
    tpu.vector_store %arg3[%c0_3, %c0_4], %3 {strides = array<i32>} : memref<32x128xbf16, #tpu.memory_space<vmem>>, vector<32x128xbf16>,
    %cst_5 = arith.constant dense<0.000000e+00> : vector<128xf32>
    %5 = vector.multi_reduction <add>, %2, %cst_5 [0] : vector<32x128xf32> to vector<128xf32>
    %6 = vector.shape_cast %5 : vector<128xf32> to vector<1x128xf32>
    %c0_6 = arith.constant 0 : index
    %c0_7 = arith.constant 0 : index
    %c0_8 = arith.constant 0 : index
    %7 = vector.load %arg4[%c0_6, %c0_7, %c0_8] : memref<1x1x128xf32, #tpu.memory_space<vmem>>, vector<1x1x128xf32>
    %8 = vector.shape_cast %7 : vector<1x1x128xf32> to vector<1x128xf32>
    %9 = vector.shape_cast %6 : vector<1x128xf32> to vector<1x1x128xf32>
    tpu.vector_store %arg4[%c0_6, %c0_7, %c0_8], %9 {strides = array<i32>} : memref<1x1x128xf32, #tpu.memory_space<vmem>>, vector<1x1x128xf32>,
    %10 = arith.mulf %2, %2 : vector<32x128xf32>
    %cst_9 = arith.constant dense<0.000000e+00> : vector<128xf32>
    %11 = vector.multi_reduction <add>, %10, %cst_9 [0] : vector<32x128xf32> to vector<128xf32>
    %12 = vector.shape_cast %11 : vector<128xf32> to vector<1x128xf32>
    %c0_10 = arith.constant 0 : index
    %c0_11 = arith.constant 0 : index
    %c0_12 = arith.constant 0 : index
    %13 = vector.load %arg5[%c0_10, %c0_11, %c0_12] : memref<1x1x128xf32, #tpu.memory_space<vmem>>, vector<1x1x128xf32>
    %14 = vector.shape_cast %13 : vector<1x1x128xf32> to vector<1x128xf32>
    %15 = vector.shape_cast %12 : vector<1x128xf32> to vector<1x1x128xf32>
    tpu.vector_store %arg5[%c0_10, %c0_11, %c0_12], %15 {strides = array<i32>} : memref<1x1x128xf32, #tpu.memory_space<vmem>>, vector<1x1x128xf32>,
    return
  }
  func.func @transform_0(%arg0: i32) -> (i32, i32) {
    %c0_i32 = arith.constant 0 : i32
    %c0_i32_0 = arith.constant 0 : i32
    return %arg0, %c0_i32 : i32, i32
  }
  func.func @transform_1(%arg0: i32) -> (i32, i32) {
    %c0_i32 = arith.constant 0 : i32
    %c0_i32_0 = arith.constant 0 : i32
    %c0_i32_1 = arith.constant 0 : i32
    return %c0_i32, %c0_i32_0 : i32, i32
  }
  func.func @transform_2(%arg0: i32) -> (i32, i32) {
    %c0_i32 = arith.constant 0 : i32
    %c0_i32_0 = arith.constant 0 : i32
    return %arg0, %c0_i32 : i32, i32
  }
  func.func @transform_3(%arg0: i32) -> (i32, i32, i32) {
    %c0_i32 = arith.constant 0 : i32
    %c0_i32_0 = arith.constant 0 : i32
    %c0_i32_1 = arith.constant 0 : i32
    return %arg0, %c0_i32, %c0_i32_0 : i32, i32, i32
  }
  func.func @transform_4(%arg0: i32) -> (i32, i32, i32) {
    %c0_i32 = arith.constant 0 : i32
    %c0_i32_0 = arith.constant 0 : i32
    %c0_i32_1 = arith.constant 0 : i32
    return %arg0, %c0_i32, %c0_i32_0 : i32, i32, i32
  }
}

module attributes {stable_mosaic.version = 11 : i64} {
  func.func @_bn_relu_kernel(%arg0: i32, %arg1: memref<32x128xbf16, #tpu.memory_space<vmem>>, %arg2: memref<1x128xf32, #tpu.memory_space<vmem>>, %arg3: memref<1x128xf32, #tpu.memory_space<vmem>>, %arg4: memref<32x128xf32, #tpu.memory_space<vmem>>) attributes {dimension_semantics = [#tpu.dimension_semantics<parallel>], iteration_bounds = array<i64: 1>, scalar_prefetch = 0 : i64, scratch_operands = 0 : i64, tpu.core_type = #tpu.core_type<tc>, window_params = [{transform_indices = @transform_0, window_bounds = array<i64: 32, 128>}, {pipeline_mode = #tpu.pipeline_mode<synchronous>, transform_indices = @transform_1, window_bounds = array<i64: 1, 128>}, {pipeline_mode = #tpu.pipeline_mode<synchronous>, transform_indices = @transform_2, window_bounds = array<i64: 1, 128>}, {transform_indices = @transform_3, window_bounds = array<i64: 32, 128>}]} {
    %c0 = arith.constant 0 : index
    %c0_0 = arith.constant 0 : index
    %0 = vector.load %arg1[%c0, %c0_0] : memref<32x128xbf16, #tpu.memory_space<vmem>>, vector<32x128xbf16>
    %1 = arith.extf %0 : vector<32x128xbf16> to vector<32x128xf32>
    %c0_1 = arith.constant 0 : index
    %c0_2 = arith.constant 0 : index
    %2 = vector.load %arg2[%c0_1, %c0_2] : memref<1x128xf32, #tpu.memory_space<vmem>>, vector<1x128xf32>
    %3 = vector.broadcast %2 : vector<1x128xf32> to vector<32x128xf32>
    %4 = arith.mulf %1, %3 : vector<32x128xf32>
    %c0_3 = arith.constant 0 : index
    %c0_4 = arith.constant 0 : index
    %5 = vector.load %arg3[%c0_3, %c0_4] : memref<1x128xf32, #tpu.memory_space<vmem>>, vector<1x128xf32>
    %6 = vector.broadcast %5 : vector<1x128xf32> to vector<32x128xf32>
    %7 = arith.addf %4, %6 : vector<32x128xf32>
    %cst = arith.constant 0.000000e+00 : f32
    %8 = vector.broadcast %cst : f32 to vector<32x128xf32>
    %9 = arith.maximumf %7, %8 : vector<32x128xf32>
    %c0_5 = arith.constant 0 : index
    %c0_6 = arith.constant 0 : index
    %10 = vector.load %arg4[%c0_5, %c0_6] : memref<32x128xf32, #tpu.memory_space<vmem>>, vector<32x128xf32>
    tpu.vector_store %arg4[%c0_5, %c0_6], %9 {strides = array<i32>} : memref<32x128xf32, #tpu.memory_space<vmem>>, vector<32x128xf32>,
    return
  }
  func.func @transform_0(%arg0: i32) -> (i32, i32) {
    %c0_i32 = arith.constant 0 : i32
    %c0_i32_0 = arith.constant 0 : i32
    return %arg0, %c0_i32 : i32, i32
  }
  func.func @transform_1(%arg0: i32) -> (i32, i32) {
    %c0_i32 = arith.constant 0 : i32
    %c0_i32_0 = arith.constant 0 : i32
    %c0_i32_1 = arith.constant 0 : i32
    return %c0_i32, %c0_i32_0 : i32, i32
  }
  func.func @transform_2(%arg0: i32) -> (i32, i32) {
    %c0_i32 = arith.constant 0 : i32
    %c0_i32_0 = arith.constant 0 : i32
    %c0_i32_1 = arith.constant 0 : i32
    return %c0_i32, %c0_i32_0 : i32, i32
  }
  func.func @transform_3(%arg0: i32) -> (i32, i32) {
    %c0_i32 = arith.constant 0 : i32
    %c0_i32_0 = arith.constant 0 : i32
    return %arg0, %c0_i32 : i32, i32
  }
}

</mosaic_0001>

<llo_original>
// kernel: a_call__.3
$region0: #{a_call__.3}
  #allocation0 [shape = 'u32[]', space=smem, size = 0x4, offset = 0x4, fixed_abs, tag = 'smem constant byte address 0x4 - core index']
  #allocation1 [shape = 'u32[144,128]{1,0:T(1,128)}', space=vmem, size = 0x12000, scoped, tag = 'internal scratch']
  %s0 = inlined_call_operand.vmem [shape: bf16[128,128], index: 0, kind: input, shape index: {}]
  %s1 = inlined_call_operand.vmem [shape: bf16[128,128], index: 1, kind: input, shape index: {}]
  %s2 = inlined_call_operand.vmem [shape: bf16[128,128], index: 2, kind: output, shape index: {0}]
  %s3 = inlined_call_operand.vmem [shape: f32[1,1,128], index: 3, kind: output, shape index: {1}]
  %s4 = inlined_call_operand.vmem [shape: f32[1,1,128], index: 4, kind: output, shape index: {2}]
  %5 = xla_tuple %s2, %s3, %s4
  %s6 = sld [smem:[#allocation0]]
  $region34: #{a_call__.3} parent=0
    _
  %s8 = ssub.s32 1, %s6
  %s9 = scalar_select 0, %s8, %s6
  // Predicated region
  $region2: #{a_call__.3} parent=0 // pred_check
    _
  $region3: #{a_call__.3} parent=0 // pred_check_branch
    %11 = sbr.rel (0) target = $region5
  $region4: #{a_call__.3} parent=0 // pred_region
    _
  $region5: #{a_call__.3} parent=0 // pred_fallthru
    _
  // Predicated region
  $region6: #{a_call__.3} parent=0 // pred_check
    _
  $region7: #{a_call__.3} parent=0 // pred_check_branch
    %13 = sbr.rel (0) target = $region9
  $region8: #{a_call__.3} parent=0 // pred_region
    _
  $region9: #{a_call__.3} parent=0 // pred_fallthru
    _
  %v15 = vld [vmem:[%s0] sm:$0xf]
  %v16 = vld [vmem:[%s0 + $0x4] sm:$0xf]
  %v17 = vld [vmem:[%s0 + $0x8] sm:$0xf]
  %v18 = vld [vmem:[%s0 + $0xc] sm:$0xf]
  %v19 = vld [vmem:[%s0 + $0x10] sm:$0xf]
  %v20 = vld [vmem:[%s0 + $0x14] sm:$0xf]
  %v21 = vld [vmem:[%s0 + $0x18] sm:$0xf]
  %v22 = vld [vmem:[%s0 + $0x1c] sm:$0xf]
  %v23 = vld [vmem:[%s0 + $0x20] sm:$0xf]
  %v24 = vld [vmem:[%s0 + $0x24] sm:$0xf]
  %v25 = vld [vmem:[%s0 + $0x28] sm:$0xf]
  %v26 = vld [vmem:[%s0 + $0x2c] sm:$0xf]
  %v27 = vld [vmem:[%s0 + $0x30] sm:$0xf]
  %v28 = vld [vmem:[%s0 + $0x34] sm:$0xf]
  %v29 = vld [vmem:[%s0 + $0x38] sm:$0xf]
  %v30 = vld [vmem:[%s0 + $0x3c] sm:$0xf]
  %v31 = vld [vmem:[%s1] sm:$0xf]
  %v32 = vld [vmem:[%s1 + $0x4] sm:$0xf]
  %v33 = vld [vmem:[%s1 + $0x8] sm:$0xf]
  %v34 = vld [vmem:[%s1 + $0xc] sm:$0xf]
  %v35 = vld [vmem:[%s1 + $0x10] sm:$0xf]
  %v36 = vld [vmem:[%s1 + $0x14] sm:$0xf]
  %v37 = vld [vmem:[%s1 + $0x18] sm:$0xf]
  %v38 = vld [vmem:[%s1 + $0x1c] sm:$0xf]
  %v39 = vld [vmem:[%s1 + $0x20] sm:$0xf]
  %v40 = vld [vmem:[%s1 + $0x24] sm:$0xf]
  %v41 = vld [vmem:[%s1 + $0x28] sm:$0xf]
  %v42 = vld [vmem:[%s1 + $0x2c] sm:$0xf]
  %v43 = vld [vmem:[%s1 + $0x30] sm:$0xf]
  %v44 = vld [vmem:[%s1 + $0x34] sm:$0xf]
  %v45 = vld [vmem:[%s1 + $0x38] sm:$0xf]
  %v46 = vld [vmem:[%s1 + $0x3c] sm:$0xf]
  %v63 = vunpack.c.l.b16 %v15
  %v64 = vunpack.c.l.b16 %v16
  %v65 = vunpack.c.l.b16 %v17
  %v66 = vunpack.c.l.b16 %v18
  %v67 = vunpack.c.l.b16 %v19
  %v68 = vunpack.c.l.b16 %v20
  %v69 = vunpack.c.l.b16 %v21
  %v70 = vunpack.c.l.b16 %v22
  %v71 = vunpack.c.l.b16 %v23
  %v72 = vunpack.c.l.b16 %v24
  %v73 = vunpack.c.l.b16 %v25
  %v74 = vunpack.c.l.b16 %v26
  %v75 = vunpack.c.l.b16 %v27
  %v76 = vunpack.c.l.b16 %v28
  %v77 = vunpack.c.l.b16 %v29
  %v78 = vunpack.c.l.b16 %v30
  %v79 = vpack.c.b16 %v64, %v63
  %v80 = vpack.c.b16 %v66, %v65
  %v81 = vpack.c.b16 %v68, %v67
  %v82 = vpack.c.b16 %v70, %v69
  %v83 = vpack.c.b16 %v72, %v71
  %v84 = vpack.c.b16 %v74, %v73
  %v85 = vpack.c.b16 %v76, %v75
  %v86 = vpack.c.b16 %v78, %v77
  %v111 = vunpack.c.l.b16 %v31
  %v112 = vunpack.c.l.b16 %v32
  %v113 = vunpack.c.l.b16 %v33
  %v114 = vunpack.c.l.b16 %v34
  %v115 = vunpack.c.l.b16 %v35
  %v116 = vunpack.c.l.b16 %v36
  %v117 = vunpack.c.l.b16 %v37
  %v118 = vunpack.c.l.b16 %v38
  %v119 = vunpack.c.l.b16 %v39
  %v120 = vunpack.c.l.b16 %v40
  %v121 = vunpack.c.l.b16 %v41
  %v122 = vunpack.c.l.b16 %v42
  %v123 = vunpack.c.l.b16 %v43
  %v124 = vunpack.c.l.b16 %v44
  %v125 = vunpack.c.l.b16 %v45
  %v126 = vunpack.c.l.b16 %v46
  %v127 = vpack.c.b16 %v112, %v111
  %v128 = vpack.c.b16 %v114, %v113
  %v129 = vpack.c.b16 %v116, %v115
  %v130 = vpack.c.b16 %v118, %v117
  %v131 = vpack.c.b16 %v120, %v119
  %v132 = vpack.c.b16 %v122, %v121
  %v133 = vpack.c.b16 %v124, %v123
  %v134 = vpack.c.b16 %v126, %v125
  %143 = vmatprep.subr.bf16.mxu0 0
  %144 = vmatpush1.bf16.msra.mxu0 %v134
  %145 = vmatprep.subr.bf16.mxu0 0
  %146 = vmatpush1.bf16.msra.mxu0 %v133
  %147 = vmatprep.subr.bf16.mxu0 0
  %148 = vmatpush1.bf16.msra.mxu0 %v132
  %149 = vmatprep.subr.bf16.mxu0 0
  %150 = vmatpush1.bf16.msra.mxu0 %v131
  %151 = vmatprep.subr.bf16.mxu0 0
  %152 = vmatpush1.bf16.msra.mxu0 %v130
  %153 = vmatprep.subr.bf16.mxu0 0
  %154 = vmatpush1.bf16.msra.mxu0 %v129
  %155 = vmatprep.subr.bf16.mxu0 0
  %156 = vmatpush1.bf16.msra.mxu0 %v128
  %157 = vmatprep.subr.bf16.mxu0 0
  %158 = vmatpush1.bf16.msra.mxu0 %v127
  %159 = vmatprep.subr.bf16.mxu0 0
  %160 = vmatpush2.bf16.msra.mxu0 0
  %161 = vmatprep.subr.bf16.mxu0 0
  %162 = vmatpush2.bf16.msra.mxu0 0
  %163 = vmatprep.subr.bf16.mxu0 0
  %164 = vmatpush2.bf16.msra.mxu0 0
  %165 = vmatprep.subr.bf16.mxu0 0
  %166 = vmatpush2.bf16.msra.mxu0 0
  %167 = vmatprep.subr.bf16.mxu0 0
  %168 = vmatpush2.bf16.msra.mxu0 0
  %169 = vmatprep.subr.bf16.mxu0 0
  %170 = vmatpush2.bf16.msra.mxu0 0
  %171 = vmatprep.subr.bf16.mxu0 0
  %172 = vmatpush2.bf16.msra.mxu0 0
  %173 = vmatprep.subr.bf16.mxu0 0
  %174 = vmatpush2.bf16.msra.mxu0 0
  %175 = vmatprep.mubr.bf16.mxu0 0
  %176 = vmatmul.mubr.bf16.gmra.mxu0 %v79
  %v177 = vpop.f32.mrf.mxu0
  %v178 = vadd.f32 0.0, %v177
  %v179 = vpop.f32.mrf.mxu0
  %v180 = vpop.f32.mrf.mxu0
  %v181 = vadd.f32 0.0, %v180
  %v182 = vpop.f32.mrf.mxu0
  %183 = vmatprep.mubr.bf16.mxu0 0
  %184 = vmatmul.mubr.bf16.gmra.mxu0 %v80
  %v185 = vpop.f32.mrf.mxu0
  %v186 = vadd.f32 0.0, %v185
  %v187 = vpop.f32.mrf.mxu0
  %v188 = vpop.f32.mrf.mxu0
  %v189 = vadd.f32 0.0, %v188
  %v190 = vpop.f32.mrf.mxu0
  %191 = vmatprep.mubr.bf16.mxu0 0
  %192 = vmatmul.mubr.bf16.gmra.mxu0 %v81
  %v193 = vpop.f32.mrf.mxu0
  %v194 = vadd.f32 0.0, %v193
  %v195 = vpop.f32.mrf.mxu0
  %v196 = vpop.f32.mrf.mxu0
  %v197 = vadd.f32 0.0, %v196
  %v198 = vpop.f32.mrf.mxu0
  %199 = vmatprep.mubr.bf16.mxu0 0
  %200 = vmatmul.mubr.bf16.gmra.mxu0 %v82
  %v201 = vpop.f32.mrf.mxu0
  %v202 = vadd.f32 0.0, %v201
  %v203 = vpop.f32.mrf.mxu0
  %v204 = vpop.f32.mrf.mxu0
  %v205 = vadd.f32 0.0, %v204
  %v206 = vpop.f32.mrf.mxu0
  %207 = vmatprep.mubr.bf16.mxu0 0
  %208 = vmatmul.mubr.bf16.gmra.mxu0 %v83
  %v209 = vpop.f32.mrf.mxu0
  %v210 = vadd.f32 0.0, %v209
  %v211 = vpop.f32.mrf.mxu0
  %v212 = vpop.f32.mrf.mxu0
  %v213 = vadd.f32 0.0, %v212
  %v214 = vpop.f32.mrf.mxu0
  %215 = vmatprep.mubr.bf16.mxu0 0
  %216 = vmatmul.mubr.bf16.gmra.mxu0 %v84
  %v217 = vpop.f32.mrf.mxu0
  %v218 = vadd.f32 0.0, %v217
  %v219 = vpop.f32.mrf.mxu0
  %v220 = vpop.f32.mrf.mxu0
  %v221 = vadd.f32 0.0, %v220
  %v222 = vpop.f32.mrf.mxu0
  %223 = vmatprep.mubr.bf16.mxu0 0
  %224 = vmatmul.mubr.bf16.gmra.mxu0 %v85
  %v225 = vpop.f32.mrf.mxu0
  %v226 = vadd.f32 0.0, %v225
  %v227 = vpop.f32.mrf.mxu0
  %v228 = vpop.f32.mrf.mxu0
  %v229 = vadd.f32 0.0, %v228
  %v230 = vpop.f32.mrf.mxu0
  %231 = vmatprep.mubr.bf16.mxu0 0
  %232 = vmatmul.mubr.bf16.gmra.mxu0 %v86
  %v233 = vpop.f32.mrf.mxu0
  %v234 = vadd.f32 0.0, %v233
  %v235 = vpop.f32.mrf.mxu0
  %v236 = vpop.f32.mrf.mxu0
  %v237 = vadd.f32 0.0, %v236
  %v238 = vpop.f32.mrf.mxu0
  %239 = vdwg.mxu0
  %v240 = vpack.c.bf16 %v181, %v178
  %v241 = vpack.c.bf16 %v189, %v186
  %v242 = vpack.c.bf16 %v197, %v194
  %v243 = vpack.c.bf16 %v205, %v202
  %v244 = vpack.c.bf16 %v213, %v210
  %v245 = vpack.c.bf16 %v221, %v218
  %v246 = vpack.c.bf16 %v229, %v226
  %v247 = vpack.c.bf16 %v237, %v234
  %v256 = vunpack.c.l.b16 %v240
  %v257 = vunpack.c.h.b16 %v240
  %v258 = vunpack.c.l.b16 %v241
  %v259 = vunpack.c.h.b16 %v241
  %v260 = vunpack.c.l.b16 %v242
  %v261 = vunpack.c.h.b16 %v242
  %v262 = vunpack.c.l.b16 %v243
  %v263 = vunpack.c.h.b16 %v243
  %v264 = vunpack.c.l.b16 %v244
  %v265 = vunpack.c.h.b16 %v244
  %v266 = vunpack.c.l.b16 %v245
  %v267 = vunpack.c.h.b16 %v245
  %v268 = vunpack.c.l.b16 %v246
  %v269 = vunpack.c.h.b16 %v246
  %v270 = vunpack.c.l.b16 %v247
  %v271 = vunpack.c.h.b16 %v247
  %v272 = vpack.c.b16 %v256, %v256
  %v273 = vpack.c.b16 %v257, %v257
  %v274 = vpack.c.b16 %v258, %v258
  %v275 = vpack.c.b16 %v259, %v259
  %v276 = vpack.c.b16 %v260, %v260
  %v277 = vpack.c.b16 %v261, %v261
  %v278 = vpack.c.b16 %v262, %v262
  %v279 = vpack.c.b16 %v263, %v263
  %v280 = vpack.c.b16 %v264, %v264
  %v281 = vpack.c.b16 %v265, %v265
  %v282 = vpack.c.b16 %v266, %v266
  %v283 = vpack.c.b16 %v267, %v267
  %v284 = vpack.c.b16 %v268, %v268
  %v285 = vpack.c.b16 %v269, %v269
  %v286 = vpack.c.b16 %v270, %v270
  %v287 = vpack.c.b16 %v271, %v271
  %304 = vst [vmem:[%s2] sm:$0xf] %v272
  %305 = vst [vmem:[%s2 + $0x4] sm:$0xf] %v273
  %306 = vst [vmem:[%s2 + $0x8] sm:$0xf] %v274
  %307 = vst [vmem:[%s2 + $0xc] sm:$0xf] %v275
  %308 = vst [vmem:[%s2 + $0x10] sm:$0xf] %v276
  %309 = vst [vmem:[%s2 + $0x14] sm:$0xf] %v277
  %310 = vst [vmem:[%s2 + $0x18] sm:$0xf] %v278
  %311 = vst [vmem:[%s2 + $0x1c] sm:$0xf] %v279
  %312 = vst [vmem:[%s2 + $0x20] sm:$0xf] %v280
  %313 = vst [vmem:[%s2 + $0x24] sm:$0xf] %v281
  %314 = vst [vmem:[%s2 + $0x28] sm:$0xf] %v282
  %315 = vst [vmem:[%s2 + $0x2c] sm:$0xf] %v283
  %316 = vst [vmem:[%s2 + $0x30] sm:$0xf] %v284
  %317 = vst [vmem:[%s2 + $0x34] sm:$0xf] %v285
  %318 = vst [vmem:[%s2 + $0x38] sm:$0xf] %v286
  %319 = vst [vmem:[%s2 + $0x3c] sm:$0xf] %v287
  %v320 = vadd.f32 %v178, %v181
  %v321 = vadd.f32 %v320, %v186
  %v322 = vadd.f32 %v321, %v189
  %v323 = vadd.f32 %v322, %v194
  %v324 = vadd.f32 %v323, %v197
  %v325 = vadd.f32 %v324, %v202
  %v326 = vadd.f32 %v325, %v205
  %v327 = vadd.f32 %v326, %v210
  %v328 = vadd.f32 %v327, %v213
  %v329 = vadd.f32 %v328, %v218
  %v330 = vadd.f32 %v329, %v221
  %v331 = vadd.f32 %v330, %v226
  %v332 = vadd.f32 %v331, %v229
  %v333 = vadd.f32 %v332, %v234
  %v334 = vadd.f32 %v333, %v237
  %v335 = vrot.slane %v334, 4
  %v336 = vadd.f32 %v334, %v335
  %v337 = vrot.slane %v336, 2
  %v338 = vadd.f32 %v336, %v337
  %v339 = vrot.slane %v338, 1
  %v340 = vadd.f32 %v338, %v339
  %341 = vst [vmem:[%s3] sm:$0x1] %v340
  %v342 = vmul.f32 %v178, %v178
  %v343 = vmul.f32 %v181, %v181
  %v344 = vmul.f32 %v186, %v186
  %v345 = vmul.f32 %v189, %v189
  %v346 = vmul.f32 %v194, %v194
  %v347 = vmul.f32 %v197, %v197
  %v348 = vmul.f32 %v202, %v202
  %v349 = vmul.f32 %v205, %v205
  %v350 = vmul.f32 %v210, %v210
  %v351 = vmul.f32 %v213, %v213
  %v352 = vmul.f32 %v218, %v218
  %v353 = vmul.f32 %v221, %v221
  %v354 = vmul.f32 %v226, %v226
  %v355 = vmul.f32 %v229, %v229
  %v356 = vmul.f32 %v234, %v234
  %v357 = vmul.f32 %v237, %v237
  %v358 = vadd.f32 %v342, %v343
  %v359 = vadd.f32 %v358, %v344
  %v360 = vadd.f32 %v359, %v345
  %v361 = vadd.f32 %v360, %v346
  %v362 = vadd.f32 %v361, %v347
  %v363 = vadd.f32 %v362, %v348
  %v364 = vadd.f32 %v363, %v349
  %v365 = vadd.f32 %v364, %v350
  %v366 = vadd.f32 %v365, %v351
  %v367 = vadd.f32 %v366, %v352
  %v368 = vadd.f32 %v367, %v353
  %v369 = vadd.f32 %v368, %v354
  %v370 = vadd.f32 %v369, %v355
  %v371 = vadd.f32 %v370, %v356
  %v372 = vadd.f32 %v371, %v357
  %v373 = vrot.slane %v372, 4
  %v374 = vadd.f32 %v372, %v373
  %v375 = vrot.slane %v374, 2
  %v376 = vadd.f32 %v374, %v375
  %v377 = vrot.slane %v376, 1
  %v378 = vadd.f32 %v376, %v377
  %379 = vst [vmem:[%s4] sm:$0x1] %v378
  // Predicated region
  $region10: #{a_call__.3} parent=0 // pred_check
    _
  $region11: #{a_call__.3} parent=0 // pred_check_branch
    %381 = sbr.rel (0) target = $region13
  $region12: #{a_call__.3} parent=0 // pred_region
    _
  $region13: #{a_call__.3} parent=0 // pred_fallthru
    _
  // Predicated region
  $region14: #{a_call__.3} parent=0 // pred_check
    _
  $region15: #{a_call__.3} parent=0 // pred_check_branch
    %383 = sbr.rel (0) target = $region17
  $region16: #{a_call__.3} parent=0 // pred_region
    _
  $region17: #{a_call__.3} parent=0 // pred_fallthru
    _
  // Predicated region
  $region18: #{a_call__.3} parent=0 // pred_check
    _
  $region19: #{a_call__.3} parent=0 // pred_check_branch
    %385 = sbr.rel (0) target = $region21
  $region20: #{a_call__.3} parent=0 // pred_region
    _
  $region21: #{a_call__.3} parent=0 // pred_fallthru
    _
  // Predicated region
  $region22: #{a_call__.3} parent=0 // pred_check
    _
  $region23: #{a_call__.3} parent=0 // pred_check_branch
    %387 = sbr.rel (0) target = $region25
  $region24: #{a_call__.3} parent=0 // pred_region
    _
  $region25: #{a_call__.3} parent=0 // pred_fallthru
    _
  // Predicated region
  $region26: #{a_call__.3} parent=0 // pred_check
    _
  $region27: #{a_call__.3} parent=0 // pred_check_branch
    %389 = sbr.rel (0) target = $region29
  $region28: #{a_call__.3} parent=0 // pred_region
    _
  $region29: #{a_call__.3} parent=0 // pred_fallthru
    _
  // Predicated region
  $region30: #{a_call__.3} parent=0 // pred_check
    _
  $region31: #{a_call__.3} parent=0 // pred_check_branch
    %391 = sbr.rel (0) target = $region33
  $region32: #{a_call__.3} parent=0 // pred_region
    _
  $region33: #{a_call__.3} parent=0 // pred_fallthru
    _

// kernel: a_call__.5
$region0: #{a_call__.5}
  #allocation0 [shape = 'u32[]', space=smem, size = 0x4, offset = 0x4, fixed_abs, tag = 'smem constant byte address 0x4 - core index']
  #allocation1 [shape = 'u32[144,128]{1,0:T(1,128)}', space=vmem, size = 0x12000, scoped, tag = 'internal scratch']
  %s0 = inlined_call_operand.vmem [shape: bf16[32,128], index: 0, kind: input, shape index: {}]
  %s1 = inlined_call_operand.vmem [shape: f32[1,128], index: 1, kind: input, shape index: {}]
  %s2 = inlined_call_operand.vmem [shape: f32[1,128], index: 2, kind: input, shape index: {}]
  %s3 = inlined_call_operand.hbm [shape: f32[32,128], index: 3, kind: output, shape index: {}]
  %s4 = sld [smem:[#allocation0]]
  $region22: #{a_call__.5} parent=0
    _
  %s6 = ssub.s32 1, %s4
  %s7 = scalar_select 0, %s6, %s4
  $region1: #{a_call__.5} parent=0
    #allocation2 [shape = 'u8[16384]{0}', space=vmem, size = 0x4000, scoped, tag = 'output window, operand 0, single buffered']
    #allocation3 [shape = 's32[1]{0}', space=sflag, size = 0x4, scoped, tag = 'scoped memory for a_call__.5']
    %8 = vsyncpa [#allocation3], 0
    // Predicated region
    $region2: #{a_call__.5} parent=1 // pred_check
      _
    $region3: #{a_call__.5} parent=1 // pred_check_branch
      %10 = sbr.rel (0) target = $region5
    $region4: #{a_call__.5} parent=1 // pred_region
      _
    $region5: #{a_call__.5} parent=1 // pred_fallthru
      _
    // Predicated region
    $region6: #{a_call__.5} parent=1 // pred_check
      _
    $region7: #{a_call__.5} parent=1 // pred_check_branch
      %12 = sbr.rel (0) target = $region9
    $region8: #{a_call__.5} parent=1 // pred_region
      _
    $region9: #{a_call__.5} parent=1 // pred_fallthru
      _
    // Predicated region
    $region10: #{a_call__.5} parent=1 // pred_check
      _
    $region11: #{a_call__.5} parent=1 // pred_check_branch
      %14 = sbr.rel (0) target = $region13
    $region12: #{a_call__.5} parent=1 // pred_region
      _
    $region13: #{a_call__.5} parent=1 // pred_fallthru
      _
    %v15 = vld [vmem:[%s0] sm:$0xf]
    %v16 = vld [vmem:[%s0 + $0x4] sm:$0xf]
    %v17 = vld [vmem:[%s0 + $0x8] sm:$0xf]
    %v18 = vld [vmem:[%s0 + $0xc] sm:$0xf]
    %v19 = vunpack.c.l.bf16 %v15
    %v20 = vunpack.c.l.bf16 %v16
    %v21 = vunpack.c.l.bf16 %v17
    %v22 = vunpack.c.l.bf16 %v18
    %v23 = vld [vmem:[%s1] sm:$0x1]
    %v25 = vlaneseq
    %v26 = vshrl.u32 %v25, 7
    %v27 = vsub.s32 0, %v26
    %v28 = vrot.slane %v23, %v27
    %v30 = vmul.f32 %v19, %v28
    %v31 = vmul.f32 %v20, %v28
    %v32 = vmul.f32 %v21, %v28
    %v33 = vmul.f32 %v22, %v28
    %v34 = vld [vmem:[%s2] sm:$0x1]
    %v36 = vlaneseq
    %v37 = vshrl.u32 %v36, 7
    %v38 = vsub.s32 0, %v37
    %v39 = vrot.slane %v34, %v38
    %v41 = vadd.f32 %v30, %v39
    %v42 = vadd.f32 %v31, %v39
    %v43 = vadd.f32 %v32, %v39
    %v44 = vadd.f32 %v33, %v39
    %v45 = vmax.f32 %v41, 0.0
    %v46 = vmax.f32 %v42, 0.0
    %v47 = vmax.f32 %v43, 0.0
    %v48 = vmax.f32 %v44, 0.0
    %49 = vst [vmem:[#allocation2] sm:$0xff] %v45
    %50 = vst [vmem:[#allocation2 + $0x8] sm:$0xff] %v46
    %51 = vst [vmem:[#allocation2 + $0x10] sm:$0xff] %v47
    %52 = vst [vmem:[#allocation2 + $0x18] sm:$0xff] %v48
    // Predicated region
    $region14: #{a_call__.5} parent=1 // pred_check
      _
    $region15: #{a_call__.5} parent=1 // pred_check_branch
      %54 = sbr.rel (0) target = $region17
    $region16: #{a_call__.5} parent=1 // pred_region
      %s56 = ssub.s32 512, 512
      %57 = vsyncadd [#allocation3], %s56
      %s58 = sshll.u32 [#allocation2], 4
      %s59 = int_to_ptr.vmem [resolvable:$true] %s58
      %64 = dma.vmem_to_hbm [thread:$0]  %s59, 512, %s3, [#allocation3], 128, 128, 8
    $region17: #{a_call__.5} parent=1 // pred_fallthru
      _
    // Predicated region
    $region18: #{a_call__.5} parent=1 // pred_check
      _
    $region19: #{a_call__.5} parent=1 // pred_check_branch
      %66 = sbr.rel (0) target = $region21
    $region20: #{a_call__.5} parent=1 // pred_region
      %67 = dma.done [#allocation3], 512
    $region21: #{a_call__.5} parent=1 // pred_fallthru
      _
    %68 = vsyncpa [#allocation3], 1

// kernel: a_call__.4
$region0: #{a_call__.4}
  #allocation0 [shape = 'u32[]', space=smem, size = 0x4, offset = 0x4, fixed_abs, tag = 'smem constant byte address 0x4 - core index']
  #allocation1 [shape = 'u32[144,128]{1,0:T(1,128)}', space=vmem, size = 0x12000, scoped, tag = 'internal scratch']
  %s0 = inlined_call_operand.vmem [shape: bf16[32,128], index: 0, kind: input, shape index: {}]
  %s1 = inlined_call_operand.vmem [shape: bf16[128,128], index: 1, kind: input, shape index: {}]
  %s2 = inlined_call_operand.vmem [shape: bf16[32,128], index: 2, kind: output, shape index: {0}]
  %s3 = inlined_call_operand.vmem [shape: f32[1,1,128], index: 3, kind: output, shape index: {1}]
  %s4 = inlined_call_operand.vmem [shape: f32[1,1,128], index: 4, kind: output, shape index: {2}]
  %5 = xla_tuple %s2, %s3, %s4
  %s6 = sld [smem:[#allocation0]]
  $region34: #{a_call__.4} parent=0
    _
  %s8 = ssub.s32 1, %s6
  %s9 = scalar_select 0, %s8, %s6
  // Predicated region
  $region2: #{a_call__.4} parent=0 // pred_check
    _
  $region3: #{a_call__.4} parent=0 // pred_check_branch
    %11 = sbr.rel (0) target = $region5
  $region4: #{a_call__.4} parent=0 // pred_region
    _
  $region5: #{a_call__.4} parent=0 // pred_fallthru
    _
  // Predicated region
  $region6: #{a_call__.4} parent=0 // pred_check
    _
  $region7: #{a_call__.4} parent=0 // pred_check_branch
    %13 = sbr.rel (0) target = $region9
  $region8: #{a_call__.4} parent=0 // pred_region
    _
  $region9: #{a_call__.4} parent=0 // pred_fallthru
    _
  %v15 = vld [vmem:[%s0] sm:$0xf]
  %v16 = vld [vmem:[%s0 + $0x4] sm:$0xf]
  %v17 = vld [vmem:[%s0 + $0x8] sm:$0xf]
  %v18 = vld [vmem:[%s0 + $0xc] sm:$0xf]
  %v19 = vld [vmem:[%s1] sm:$0xf]
  %v20 = vld [vmem:[%s1 + $0x4] sm:$0xf]
  %v21 = vld [vmem:[%s1 + $0x8] sm:$0xf]
  %v22 = vld [vmem:[%s1 + $0xc] sm:$0xf]
  %v23 = vld [vmem:[%s1 + $0x10] sm:$0xf]
  %v24 = vld [vmem:[%s1 + $0x14] sm:$0xf]
  %v25 = vld [vmem:[%s1 + $0x18] sm:$0xf]
  %v26 = vld [vmem:[%s1 + $0x1c] sm:$0xf]
  %v27 = vld [vmem:[%s1 + $0x20] sm:$0xf]
  %v28 = vld [vmem:[%s1 + $0x24] sm:$0xf]
  %v29 = vld [vmem:[%s1 + $0x28] sm:$0xf]
  %v30 = vld [vmem:[%s1 + $0x2c] sm:$0xf]
  %v31 = vld [vmem:[%s1 + $0x30] sm:$0xf]
  %v32 = vld [vmem:[%s1 + $0x34] sm:$0xf]
  %v33 = vld [vmem:[%s1 + $0x38] sm:$0xf]
  %v34 = vld [vmem:[%s1 + $0x3c] sm:$0xf]
  %v39 = vunpack.c.l.b16 %v15
  %v40 = vunpack.c.l.b16 %v16
  %v41 = vunpack.c.l.b16 %v17
  %v42 = vunpack.c.l.b16 %v18
  %v43 = vpack.c.b16 %v40, %v39
  %v44 = vpack.c.b16 %v42, %v41
  %v63 = vunpack.c.l.b16 %v19
  %v64 = vunpack.c.l.b16 %v20
  %v65 = vunpack.c.l.b16 %v21
  %v66 = vunpack.c.l.b16 %v22
  %v67 = vunpack.c.l.b16 %v23
  %v68 = vunpack.c.l.b16 %v24
  %v69 = vunpack.c.l.b16 %v25
  %v70 = vunpack.c.l.b16 %v26
  %v71 = vunpack.c.l.b16 %v27
  %v72 = vunpack.c.l.b16 %v28
  %v73 = vunpack.c.l.b16 %v29
  %v74 = vunpack.c.l.b16 %v30
  %v75 = vunpack.c.l.b16 %v31
  %v76 = vunpack.c.l.b16 %v32
  %v77 = vunpack.c.l.b16 %v33
  %v78 = vunpack.c.l.b16 %v34
  %v79 = vpack.c.b16 %v64, %v63
  %v80 = vpack.c.b16 %v66, %v65
  %v81 = vpack.c.b16 %v68, %v67
  %v82 = vpack.c.b16 %v70, %v69
  %v83 = vpack.c.b16 %v72, %v71
  %v84 = vpack.c.b16 %v74, %v73
  %v85 = vpack.c.b16 %v76, %v75
  %v86 = vpack.c.b16 %v78, %v77
  %95 = vmatprep.subr.bf16.mxu0 0
  %96 = vmatpush1.bf16.msra.mxu0 %v86
  %97 = vmatprep.subr.bf16.mxu0 0
  %98 = vmatpush1.bf16.msra.mxu0 %v85
  %99 = vmatprep.subr.bf16.mxu0 0
  %100 = vmatpush1.bf16.msra.mxu0 %v84
  %101 = vmatprep.subr.bf16.mxu0 0
  %102 = vmatpush1.bf16.msra.mxu0 %v83
  %103 = vmatprep.subr.bf16.mxu0 0
  %104 = vmatpush1.bf16.msra.mxu0 %v82
  %105 = vmatprep.subr.bf16.mxu0 0
  %106 = vmatpush1.bf16.msra.mxu0 %v81
  %107 = vmatprep.subr.bf16.mxu0 0
  %108 = vmatpush1.bf16.msra.mxu0 %v80
  %109 = vmatprep.subr.bf16.mxu0 0
  %110 = vmatpush1.bf16.msra.mxu0 %v79
  %111 = vmatprep.subr.bf16.mxu0 0
  %112 = vmatpush2.bf16.msra.mxu0 0
  %113 = vmatprep.subr.bf16.mxu0 0
  %114 = vmatpush2.bf16.msra.mxu0 0
  %115 = vmatprep.subr.bf16.mxu0 0
  %116 = vmatpush2.bf16.msra.mxu0 0
  %117 = vmatprep.subr.bf16.mxu0 0
  %118 = vmatpush2.bf16.msra.mxu0 0
  %119 = vmatprep.subr.bf16.mxu0 0
  %120 = vmatpush2.bf16.msra.mxu0 0
  %121 = vmatprep.subr.bf16.mxu0 0
  %122 = vmatpush2.bf16.msra.mxu0 0
  %123 = vmatprep.subr.bf16.mxu0 0
  %124 = vmatpush2.bf16.msra.mxu0 0
  %125 = vmatprep.subr.bf16.mxu0 0
  %126 = vmatpush2.bf16.msra.mxu0 0
  %127 = vmatprep.mubr.bf16.mxu0 0
  %128 = vmatmul.mubr.bf16.gmra.mxu0 %v43
  %v129 = vpop.f32.mrf.mxu0
  %v130 = vadd.f32 0.0, %v129
  %v131 = vpop.f32.mrf.mxu0
  %v132 = vpop.f32.mrf.mxu0
  %v133 = vadd.f32 0.0, %v132
  %v134 = vpop.f32.mrf.mxu0
  %135 = vmatprep.mubr.bf16.mxu0 0
  %136 = vmatmul.mubr.bf16.gmra.mxu0 %v44
  %v137 = vpop.f32.mrf.mxu0
  %v138 = vadd.f32 0.0, %v137
  %v139 = vpop.f32.mrf.mxu0
  %v140 = vpop.f32.mrf.mxu0
  %v141 = vadd.f32 0.0, %v140
  %v142 = vpop.f32.mrf.mxu0
  %143 = vdwg.mxu0
  %v144 = vpack.c.bf16 %v133, %v130
  %v145 = vpack.c.bf16 %v141, %v138
  %v148 = vunpack.c.l.b16 %v144
  %v149 = vunpack.c.h.b16 %v144
  %v150 = vunpack.c.l.b16 %v145
  %v151 = vunpack.c.h.b16 %v145
  %v152 = vpack.c.b16 %v148, %v148
  %v153 = vpack.c.b16 %v149, %v149
  %v154 = vpack.c.b16 %v150, %v150
  %v155 = vpack.c.b16 %v151, %v151
  %160 = vst [vmem:[%s2] sm:$0xf] %v152
  %161 = vst [vmem:[%s2 + $0x4] sm:$0xf] %v153
  %162 = vst [vmem:[%s2 + $0x8] sm:$0xf] %v154
  %163 = vst [vmem:[%s2 + $0xc] sm:$0xf] %v155
  %v164 = vadd.f32 %v130, %v133
  %v165 = vadd.f32 %v164, %v138
  %v166 = vadd.f32 %v165, %v141
  %v167 = vrot.slane %v166, 4
  %v168 = vadd.f32 %v166, %v167
  %v169 = vrot.slane %v168, 2
  %v170 = vadd.f32 %v168, %v169
  %v171 = vrot.slane %v170, 1
  %v172 = vadd.f32 %v170, %v171
  %173 = vst [vmem:[%s3] sm:$0x1] %v172
  %v174 = vmul.f32 %v130, %v130
  %v175 = vmul.f32 %v133, %v133
  %v176 = vmul.f32 %v138, %v138
  %v177 = vmul.f32 %v141, %v141
  %v178 = vadd.f32 %v174, %v175
  %v179 = vadd.f32 %v178, %v176
  %v180 = vadd.f32 %v179, %v177
  %v181 = vrot.slane %v180, 4
  %v182 = vadd.f32 %v180, %v181
  %v183 = vrot.slane %v182, 2
  %v184 = vadd.f32 %v182, %v183
  %v185 = vrot.slane %v184, 1
  %v186 = vadd.f32 %v184, %v185
  %187 = vst [vmem:[%s4] sm:$0x1] %v186
  // Predicated region
  $region10: #{a_call__.4} parent=0 // pred_check
    _
  $region11: #{a_call__.4} parent=0 // pred_check_branch
    %189 = sbr.rel (0) target = $region13
  $region12: #{a_call__.4} parent=0 // pred_region
    _
  $region13: #{a_call__.4} parent=0 // pred_fallthru
    _
  // Predicated region
  $region14: #{a_call__.4} parent=0 // pred_check
    _
  $region15: #{a_call__.4} parent=0 // pred_check_branch
    %191 = sbr.rel (0) target = $region17
  $region16: #{a_call__.4} parent=0 // pred_region
    _
  $region17: #{a_call__.4} parent=0 // pred_fallthru
    _
  // Predicated region
  $region18: #{a_call__.4} parent=0 // pred_check
    _
  $region19: #{a_call__.4} parent=0 // pred_check_branch
    %193 = sbr.rel (0) target = $region21
  $region20: #{a_call__.4} parent=0 // pred_region
    _
  $region21: #{a_call__.4} parent=0 // pred_fallthru
    _
  // Predicated region
  $region22: #{a_call__.4} parent=0 // pred_check
    _
  $region23: #{a_call__.4} parent=0 // pred_check_branch
    %195 = sbr.rel (0) target = $region25
  $region24: #{a_call__.4} parent=0 // pred_region
    _
  $region25: #{a_call__.4} parent=0 // pred_fallthru
    _
  // Predicated region
  $region26: #{a_call__.4} parent=0 // pred_check
    _
  $region27: #{a_call__.4} parent=0 // pred_check_branch
    %197 = sbr.rel (0) target = $region29
  $region28: #{a_call__.4} parent=0 // pred_region
    _
  $region29: #{a_call__.4} parent=0 // pred_fallthru
    _
  // Predicated region
  $region30: #{a_call__.4} parent=0 // pred_check
    _
  $region31: #{a_call__.4} parent=0 // pred_check_branch
    %199 = sbr.rel (0) target = $region33
  $region32: #{a_call__.4} parent=0 // pred_region
    _
  $region33: #{a_call__.4} parent=0 // pred_fallthru
    _

</llo_original>
